<compile_context>
chip_gen: v7x
topology: tpu7x:2x2x1
jax: 0.10.0
libtpu: 0.0.40
codegen_flags: <defaults>
</compile_context>

<pallas_src>
import functools
import numpy as np
import jax
import jax.numpy as jnp
from jax.experimental import pallas as pl
from jax.experimental.pallas import tpu as pltpu


def _gcn_fused_kernel(te_ref, x_ref, g_ref, kstack_ref, wbd_ref, bias_ref,
                      o_ref, *, kt, n_sup, n_batch, t_len, nc):
    # te_ref    : (B, kt+1)            SMEM scalar prefetch; time-emb scalars
    # x_ref     : (B*T, N*C_in)        bf16; row = b*T + t, col = v*C_in + k
    # g_ref     : (N*C_in, (kt+1)*N*C) bf16; kron(I_N, wn_i), heads concatenated
    # kstack_ref: (kt*N*C, N*C)        bf16; row-block i = sum_s kron((a_s^(kt-i))^T, I_C)
    # wbd_ref   : (B*C_mlp, B*C_in)    bf16; kron(I_B, mlp_w)
    # bias_ref  : (B*C_mlp, N*T)       f32;  conv bias pre-broadcast (lane-dense)
    # o_ref     : (B*C_mlp, N*T)       f32;  fused conv output
    f32 = jnp.float32
    bf16 = jnp.bfloat16

    # 1) All (kt+1) head projections for the whole batch: ONE wide bf16 MXU
    #    matmul with f32 accumulation.
    y = jnp.dot(x_ref[...], g_ref[...], preferred_element_type=f32)  # (B*T, (kt+1)*nc)

    # 2) Per-(batch, head) time-embedding scaling: SMEM scalar * (T, N*C) block
    #    on the VPU (time_emb is no longer folded into g).
    def scaled_head(i):
        col = y[:, i * nc:(i + 1) * nc]                               # (B*T, N*C)
        return jnp.concatenate(
            [col[bb * t_len:(bb + 1) * t_len, :] * te_ref[bb, i]
             for bb in range(n_batch)], axis=0)

    head_lo = jnp.concatenate([scaled_head(i) for i in range(kt)], axis=1)
    head_hi = scaled_head(kt)                                         # (B*T, N*C)

    # 3) Graph propagation, all supports & hops in ONE matmul:
    #    z_final = sum_i ys_i @ (sum_s K_s^(kt-i)),  K_s = kron(a_s^T, I_C).
    #    The i = kt term is sum_s K_s^0 = S*I -> just a scalar multiply.
    acc = (jnp.dot(head_lo.astype(bf16), kstack_ref[...],
                   preferred_element_type=f32)
           + float(n_sup) * head_hi)                                  # (B*T, N*C)

    # 4) Fused 1x1-conv "mlp".  With T == C_in each per-batch (T, N*C) row
    #    block of acc already *is* the module's raw reshape(b, c_in, n, t)
    #    buffer, so kron(I_B, mlp_w) turns the whole batch's conv into one
    #    matmul and one unmasked lane-dense (B*C_mlp, N*T) store.
    o_ref[...] = (jnp.dot(wbd_ref[...], acc.astype(bf16),
                          preferred_element_type=f32) + bias_ref[...])


def gcn_forward(x, supports, time_emb, w_stack, mlp_w, mlp_b, *, kt):
    """x: (B, C_in, N, T); supports: (S, N, N); time_emb: (B, kt+1);
    w_stack: (kt+1, C_in, C_out); mlp_w: (C_mlp, C_in); mlp_b: (C_mlp,)."""
    b, c_in, n, t = x.shape
    kt1, _, c_out = w_stack.shape
    s = supports.shape[0]
    c_mlp = mlp_w.shape[0]
    nc = n * c_out
    assert kt1 == kt + 1 and kt >= 1
    assert c_out == c_in, "gcn's raw reshape requires c_out == c_in"
    assert t == c_in, ("fused in-kernel mlp requires T == C_in so the raw "
                       "reshape is a pure reinterpretation (no relayout)")
    # TODO(synk): for T != C_in the reshape becomes a lane-dim relayout; run the
    #             mlp as a separate path instead of reshaping inside the kernel.
    assert nc <= 512, "kron-expanded operands too large for VMEM; tile N"
    # TODO(synk): N-tiled fallback for nc > 512 (esp. v7x's 64 MiB VMEM).

    f32, bf16 = jnp.float32, jnp.bfloat16
    x = x.astype(f32)
    supports = supports.astype(f32)
    time_emb = time_emb.astype(f32)
    w_stack = w_stack.astype(f32)
    mlp_w = mlp_w.astype(f32)
    mlp_b = mlp_b.astype(f32)

    # ---- tiny one-shot, batch-independent preprocessing (plain JAX) --------
    # per-head Frobenius-norm normalization: w_i / (||w_i||_F / sqrt(C_out))
    fnorm = jnp.sqrt(jnp.sum(w_stack * w_stack, axis=(1, 2)))            # (kt+1,)
    wn = w_stack * (jnp.sqrt(f32(c_out)) / fnorm)[:, None, None]
    # head projections in kron(I_N, wn_i) form (batch-independent), so the
    # projection lands directly in the (B*T, N*C) chain layout.
    eye_n = jnp.eye(n, dtype=f32)
    g = jnp.einsum('vu,ikc->vkiuc', eye_n, wn).reshape(n * c_in, kt1 * nc)
    # hop-power matrices K_j = sum_s kron((a_s^j)^T, I_C), stacked j = kt..1,
    # collapsing all hops/supports into a single (kt*N*C)-deep matmul.
    eye_c = jnp.eye(c_out, dtype=f32)
    kpow = []
    apow = supports
    for j in range(1, kt + 1):
        kpow.append(jnp.einsum('svw,dc->wdvc', apow, eye_c).reshape(nc, nc))
        if j < kt:
            apow = jnp.einsum('svw,swu->svu', apow, supports)            # a_s^(j+1)
    kstack = jnp.concatenate(kpow[::-1], axis=0)                          # (kt*nc, nc)
    # x in (B*T, N*C_in) layout: batch folded into the matmul M dimension.
    x_r = jnp.transpose(x, (0, 3, 2, 1)).reshape(b * t, n * c_in)
    # 1x1-conv for the whole batch as one matmul: kron(I_B, mlp_w).
    eye_b = jnp.eye(b, dtype=f32)
    wbd = jnp.einsum('ab,ok->aobk', eye_b, mlp_w).reshape(b * c_mlp, b * c_in)
    # bias pre-broadcast so the epilogue add is lane-dense (no width-1 block).
    bias_full = jnp.broadcast_to(jnp.tile(mlp_b, b)[:, None], (b * c_mlp, n * t))

    kern = functools.partial(_gcn_fused_kernel, kt=kt, n_sup=s,
                             n_batch=b, t_len=t, nc=nc)

    # tiny latency-bound kernel: give XLA an accurate (small) cost.
    flops = (2 * (b * t) * (n * c_in) * (kt1 * nc)
             + 2 * (b * t) * (kt * nc) * nc
             + 2 * (b * c_mlp) * (b * c_in) * nc)
    bytes_accessed = (b * t * n * c_in * 2 + n * c_in * kt1 * nc * 2
                      + kt * nc * nc * 2 + (b * c_mlp) * (b * c_in) * 2
                      + b * c_mlp * n * t * 4 + b * kt1 * 4
                      + b * c_mlp * n * t * 4)

    out_flat = pl.pallas_call(
        kern,
        out_shape=jax.ShapeDtypeStruct((b * c_mlp, n * t), f32),
        grid_spec=pltpu.PrefetchScalarGridSpec(
            num_scalar_prefetch=1,            # time_emb -> SMEM scalars
            grid=(1,),                        # single step: whole batch at once
            in_specs=[
                pl.BlockSpec((b * t, n * c_in), lambda i, te: (0, 0)),
                pl.BlockSpec((n * c_in, kt1 * nc), lambda i, te: (0, 0)),
                pl.BlockSpec((kt * nc, nc), lambda i, te: (0, 0)),
                pl.BlockSpec((b * c_mlp, b * c_in), lambda i, te: (0, 0)),
                pl.BlockSpec((b * c_mlp, n * t), lambda i, te: (0, 0)),
            ],
            out_specs=pl.BlockSpec((b * c_mlp, n * t), lambda i, te: (0, 0)),
        ),
        compiler_params=pltpu.CompilerParams(
            dimension_semantics=("arbitrary",)),
        cost_estimate=pl.CostEstimate(flops=flops, transcendentals=0,
                                      bytes_accessed=bytes_accessed),
    )(time_emb, x_r.astype(bf16), g.astype(bf16), kstack.astype(bf16),
      wbd.astype(bf16), bias_full)

    # F.dropout(training=False) is the identity.
    return out_flat.reshape(b, c_mlp, n, t)


def gcn_reference(x, supports, time_emb, w_stack, mlp_w, mlp_b, *, kt):
    """Pure-JAX mirror of the PyTorch forward (eval mode)."""
    xp = jnp.transpose(x, (0, 2, 3, 1))                      # (B, N, T, C_in)
    b, n, t, k = xp.shape
    c_out = w_stack.shape[2]
    norm = jnp.sqrt(jnp.sum(w_stack ** 2, axis=(1, 2))) / jnp.sqrt(c_out)
    wn = w_stack / norm[:, None, None]
    outs = []
    for si in range(supports.shape[0]):
        a = supports[si]
        z = (xp @ wn[0]) * time_emb[:, 0].reshape(b, 1, 1, 1)
        z = jnp.transpose(z, (0, 2, 1, 3)).reshape(b * t, n, -1)
        for i in range(1, kt + 1):
            yi = (xp @ wn[i]) * time_emb[:, i].reshape(b, 1, 1, 1)
            yi = jnp.transpose(yi, (0, 2, 1, 3)).reshape(b * t, n, -1)
            z = jnp.einsum('vw,pwc->pvc', a, z) + yi
        outs.append(z)
    h = sum(outs).reshape(b, k, n, t)
    out = jnp.einsum('oc,bcnt->bont', mlp_w, h) + mlp_b.reshape(1, -1, 1, 1)
    return out


if __name__ == "__main__":
    B, C_IN, C_OUT, N, T = 2, 16, 16, 8, 16   # c_out == c_in == T (module reshape)
    KT, S = 2, 3                              # kt hops, support_len=3

    key = jax.random.PRNGKey(0)
    ks = jax.random.split(key, 6)
    x = jax.random.normal(ks[0], (B, C_IN, N, T), jnp.float32)
    raw = jnp.abs(jax.random.normal(ks[1], (S, N, N), jnp.float32)) + 0.1
    supports = raw / jnp.sum(raw, axis=-1, keepdims=True)    # row-stochastic adjacencies
    time_emb = jax.random.normal(ks[2], (B, KT + 1), jnp.float32)

    # deterministic synthetic params (xavier-uniform-like), not a checkpoint
    bound = float(np.sqrt(6.0 / (C_IN + C_OUT)))
    w_stack = jax.random.uniform(ks[3], (KT + 1, C_IN, C_OUT), jnp.float32,
                                 -bound, bound)
    cb = float(1.0 / np.sqrt(C_IN))
    mlp_w = jax.random.uniform(ks[4], (C_OUT, C_IN), jnp.float32, -cb, cb)
    mlp_b = jax.random.uniform(ks[5], (C_OUT,), jnp.float32, -cb, cb)

    fwd = jax.jit(gcn_forward, static_argnames="kt")
    out = jax.block_until_ready(fwd(x, supports, time_emb, w_stack, mlp_w,
                                    mlp_b, kt=KT))

    ref = gcn_reference(x, supports, time_emb, w_stack, mlp_w, mlp_b, kt=KT)
    # bf16 MXU operands (per perf review) with f32 accumulation: validate at a
    # bf16-level tolerance against the f32 reference.
    np.testing.assert_allclose(np.asarray(out), np.asarray(ref),
                               rtol=2e-2, atol=3e-2)
    print("KERNEL_OK")
</pallas_src>

<mosaic_0001>
module attributes {stable_mosaic.version = 11 : i64} {
  func.func @_gcn_fused_kernel(%arg0: i32, %arg1: memref<2x3xf32, #tpu.memory_space<smem>>, %arg2: memref<32x128xbf16, #tpu.memory_space<vmem>>, %arg3: memref<128x384xbf16, #tpu.memory_space<vmem>>, %arg4: memref<256x128xbf16, #tpu.memory_space<vmem>>, %arg5: memref<32x32xbf16, #tpu.memory_space<vmem>>, %arg6: memref<32x128xf32, #tpu.memory_space<vmem>>, %arg7: memref<32x128xf32, #tpu.memory_space<vmem>>) attributes {dimension_semantics = [#tpu.dimension_semantics<arbitrary>], iteration_bounds = array<i64: 1>, scalar_prefetch = 1 : i64, scratch_operands = 0 : i64, tpu.core_type = #tpu.core_type<tc>, window_params = [{pipeline_mode = #tpu.pipeline_mode<synchronous>, transform_indices = @transform_0, window_bounds = array<i64: 32, 128>}, {pipeline_mode = #tpu.pipeline_mode<synchronous>, transform_indices = @transform_1, window_bounds = array<i64: 128, 384>}, {pipeline_mode = #tpu.pipeline_mode<synchronous>, transform_indices = @transform_2, window_bounds = array<i64: 256, 128>}, {pipeline_mode = #tpu.pipeline_mode<synchronous>, transform_indices = @transform_3, window_bounds = array<i64: 32, 32>}, {pipeline_mode = #tpu.pipeline_mode<synchronous>, transform_indices = @transform_4, window_bounds = array<i64: 32, 128>}, {pipeline_mode = #tpu.pipeline_mode<synchronous>, transform_indices = @transform_5, window_bounds = array<i64: 32, 128>}]} {
    %c0 = arith.constant 0 : index
    %c0_0 = arith.constant 0 : index
    %0 = vector.load %arg2[%c0, %c0_0] : memref<32x128xbf16, #tpu.memory_space<vmem>>, vector<32x128xbf16>
    %c0_1 = arith.constant 0 : index
    %c0_2 = arith.constant 0 : index
    %1 = vector.load %arg3[%c0_1, %c0_2] : memref<128x384xbf16, #tpu.memory_space<vmem>>, vector<128x384xbf16>
    %cst = arith.constant dense<0.000000e+00> : vector<32x384xf32>
    %2 = tpu.matmul %0, %1, %cst {dimension_numbers = #tpu.dot_dimension_numbers<[1], [0], [0], [1], [0, 0, 1, 1], [], []>} : vector<32x128xbf16>, vector<128x384xbf16>, vector<32x384xf32> -> vector<32x384xf32>
    %3 = vector.extract_strided_slice %2 {offsets = [0, 0], sizes = [32, 128], strides = [1, 1]} : vector<32x384xf32> to vector<32x128xf32>
    %4 = vector.extract_strided_slice %3 {offsets = [0, 0], sizes = [16, 128], strides = [1, 1]} : vector<32x128xf32> to vector<16x128xf32>
    %c0_3 = arith.constant 0 : index
    %c0_4 = arith.constant 0 : index
    %5 = memref.load %arg1[%c0_3, %c0_4] : memref<2x3xf32, #tpu.memory_space<smem>>
    %6 = vector.broadcast %5 : f32 to vector<16x128xf32>
    %7 = arith.mulf %4, %6 : vector<16x128xf32>
    %8 = vector.extract_strided_slice %3 {offsets = [16, 0], sizes = [16, 128], strides = [1, 1]} : vector<32x128xf32> to vector<16x128xf32>
    %c1 = arith.constant 1 : index
    %c0_5 = arith.constant 0 : index
    %9 = memref.load %arg1[%c1, %c0_5] : memref<2x3xf32, #tpu.memory_space<smem>>
    %10 = vector.broadcast %9 : f32 to vector<16x128xf32>
    %11 = arith.mulf %8, %10 : vector<16x128xf32>
    %12 = tpu.concatenate %7, %11 in 0 : vector<16x128xf32>, vector<16x128xf32> -> vector<32x128xf32>
    %13 = vector.extract_strided_slice %2 {offsets = [0, 128], sizes = [32, 128], strides = [1, 1]} : vector<32x384xf32> to vector<32x128xf32>
    %14 = vector.extract_strided_slice %13 {offsets = [0, 0], sizes = [16, 128], strides = [1, 1]} : vector<32x128xf32> to vector<16x128xf32>
    %c0_6 = arith.constant 0 : index
    %c1_7 = arith.constant 1 : index
    %15 = memref.load %arg1[%c0_6, %c1_7] : memref<2x3xf32, #tpu.memory_space<smem>>
    %16 = vector.broadcast %15 : f32 to vector<16x128xf32>
    %17 = arith.mulf %14, %16 : vector<16x128xf32>
    %18 = vector.extract_strided_slice %13 {offsets = [16, 0], sizes = [16, 128], strides = [1, 1]} : vector<32x128xf32> to vector<16x128xf32>
    %c1_8 = arith.constant 1 : index
    %c1_9 = arith.constant 1 : index
    %19 = memref.load %arg1[%c1_8, %c1_9] : memref<2x3xf32, #tpu.memory_space<smem>>
    %20 = vector.broadcast %19 : f32 to vector<16x128xf32>
    %21 = arith.mulf %18, %20 : vector<16x128xf32>
    %22 = tpu.concatenate %17, %21 in 0 : vector<16x128xf32>, vector<16x128xf32> -> vector<32x128xf32>
    %23 = tpu.concatenate %12, %22 in 1 : vector<32x128xf32>, vector<32x128xf32> -> vector<32x256xf32>
    %24 = vector.extract_strided_slice %2 {offsets = [0, 256], sizes = [32, 128], strides = [1, 1]} : vector<32x384xf32> to vector<32x128xf32>
    %25 = vector.extract_strided_slice %24 {offsets = [0, 0], sizes = [16, 128], strides = [1, 1]} : vector<32x128xf32> to vector<16x128xf32>
    %c0_10 = arith.constant 0 : index
    %c2 = arith.constant 2 : index
    %26 = memref.load %arg1[%c0_10, %c2] : memref<2x3xf32, #tpu.memory_space<smem>>
    %27 = vector.broadcast %26 : f32 to vector<16x128xf32>
    %28 = arith.mulf %25, %27 : vector<16x128xf32>
    %29 = vector.extract_strided_slice %24 {offsets = [16, 0], sizes = [16, 128], strides = [1, 1]} : vector<32x128xf32> to vector<16x128xf32>
    %c1_11 = arith.constant 1 : index
    %c2_12 = arith.constant 2 : index
    %30 = memref.load %arg1[%c1_11, %c2_12] : memref<2x3xf32, #tpu.memory_space<smem>>
    %31 = vector.broadcast %30 : f32 to vector<16x128xf32>
    %32 = arith.mulf %29, %31 : vector<16x128xf32>
    %33 = tpu.concatenate %28, %32 in 0 : vector<16x128xf32>, vector<16x128xf32> -> vector<32x128xf32>
    %34 = arith.truncf %23 : vector<32x256xf32> to vector<32x256xbf16>
    %c0_13 = arith.constant 0 : index
    %c0_14 = arith.constant 0 : index
    %35 = vector.load %arg4[%c0_13, %c0_14] : memref<256x128xbf16, #tpu.memory_space<vmem>>, vector<256x128xbf16>
    %cst_15 = arith.constant dense<0.000000e+00> : vector<32x128xf32>
    %36 = tpu.matmul %34, %35, %cst_15 {dimension_numbers = #tpu.dot_dimension_numbers<[1], [0], [0], [1], [0, 0, 1, 1], [], []>} : vector<32x256xbf16>, vector<256x128xbf16>, vector<32x128xf32> -> vector<32x128xf32>
    %cst_16 = arith.constant 3.000000e+00 : f32
    %37 = vector.broadcast %cst_16 : f32 to vector<32x128xf32>
    %38 = arith.mulf %37, %33 : vector<32x128xf32>
    %39 = arith.addf %36, %38 : vector<32x128xf32>
    %c0_17 = arith.constant 0 : index
    %c0_18 = arith.constant 0 : index
    %40 = vector.load %arg5[%c0_17, %c0_18] : memref<32x32xbf16, #tpu.memory_space<vmem>>, vector<32x32xbf16>
    %41 = arith.truncf %39 : vector<32x128xf32> to vector<32x128xbf16>
    %cst_19 = arith.constant dense<0.000000e+00> : vector<32x128xf32>
    %42 = tpu.matmul %40, %41, %cst_19 {dimension_numbers = #tpu.dot_dimension_numbers<[1], [0], [0], [1], [0, 0, 1, 1], [], []>} : vector<32x32xbf16>, vector<32x128xbf16>, vector<32x128xf32> -> vector<32x128xf32>
    %c0_20 = arith.constant 0 : index
    %c0_21 = arith.constant 0 : index
    %43 = vector.load %arg6[%c0_20, %c0_21] : memref<32x128xf32, #tpu.memory_space<vmem>>, vector<32x128xf32>
    %44 = arith.addf %42, %43 : vector<32x128xf32>
    %c0_22 = arith.constant 0 : index
    %c0_23 = arith.constant 0 : index
    %45 = vector.load %arg7[%c0_22, %c0_23] : memref<32x128xf32, #tpu.memory_space<vmem>>, vector<32x128xf32>
    tpu.vector_store %arg7[%c0_22, %c0_23], %44 {strides = array<i32>} : memref<32x128xf32, #tpu.memory_space<vmem>>, vector<32x128xf32>,
    return
  }
  func.func @transform_0(%arg0: i32, %arg1: memref<2x3xf32, #tpu.memory_space<smem>>) -> (i32, i32) {
    %c0_i32 = arith.constant 0 : i32
    %c0_i32_0 = arith.constant 0 : i32
    %c0_i32_1 = arith.constant 0 : i32
    return %c0_i32, %c0_i32_0 : i32, i32
  }
  func.func @transform_1(%arg0: i32, %arg1: memref<2x3xf32, #tpu.memory_space<smem>>) -> (i32, i32) {
    %c0_i32 = arith.constant 0 : i32
    %c0_i32_0 = arith.constant 0 : i32
    %c0_i32_1 = arith.constant 0 : i32
    return %c0_i32, %c0_i32_0 : i32, i32
  }
  func.func @transform_2(%arg0: i32, %arg1: memref<2x3xf32, #tpu.memory_space<smem>>) -> (i32, i32) {
    %c0_i32 = arith.constant 0 : i32
    %c0_i32_0 = arith.constant 0 : i32
    %c0_i32_1 = arith.constant 0 : i32
    return %c0_i32, %c0_i32_0 : i32, i32
  }
  func.func @transform_3(%arg0: i32, %arg1: memref<2x3xf32, #tpu.memory_space<smem>>) -> (i32, i32) {
    %c0_i32 = arith.constant 0 : i32
    %c0_i32_0 = arith.constant 0 : i32
    %c0_i32_1 = arith.constant 0 : i32
    return %c0_i32, %c0_i32_0 : i32, i32
  }
  func.func @transform_4(%arg0: i32, %arg1: memref<2x3xf32, #tpu.memory_space<smem>>) -> (i32, i32) {
    %c0_i32 = arith.constant 0 : i32
    %c0_i32_0 = arith.constant 0 : i32
    %c0_i32_1 = arith.constant 0 : i32
    return %c0_i32, %c0_i32_0 : i32, i32
  }
  func.func @transform_5(%arg0: i32, %arg1: memref<2x3xf32, #tpu.memory_space<smem>>) -> (i32, i32) {
    %c0_i32 = arith.constant 0 : i32
    %c0_i32_0 = arith.constant 0 : i32
    %c0_i32_1 = arith.constant 0 : i32
    return %c0_i32, %c0_i32_0 : i32, i32
  }
}

</mosaic_0001>

<llo_original>
// kernel: tile.8
$region0: #{tile.8}
  #allocation0 [shape = 's32[1]{0}', space=sflag, size = 0x4, scoped, tag = 'scoped memory for tile.8']
  %s0 = inlined_call_operand.vmem [shape: f32[16], index: 0, kind: input, shape index: {}]
  %s1 = inlined_call_operand.vmem [shape: f32[2,16], index: 1, kind: output, shape index: {}]
  // Predicated region
  $region2: #{tile.8} parent=0 // pred_check
    _
  $region3: #{tile.8} parent=0 // pred_check_branch
    %3 = sbr.rel (0) target = $region5
  $region4: #{tile.8} parent=0 // pred_region
    _
  $region5: #{tile.8} parent=0 // pred_fallthru
    _
  %v4 = vld [vmem:[%s0] ss:$0 sm:$0xff]
  %5 = vst [vmem:[%s1] sm:$0x3] %v4

// kernel: gcn_forward.1
$region0: #{gcn_forward.1}
  #allocation0 [shape = 'u32[]', space=smem, size = 0x4, offset = 0x4, fixed_abs, tag = 'smem constant byte address 0x4 - core index']
  #allocation1 [shape = 'u32[144,128]{1,0:T(1,128)}', space=vmem, size = 0x12000, scoped, tag = 'internal scratch']
  #allocation2 [shape = 's32[1]{0}', space=sflag, size = 0x4, scoped, tag = 'scoped memory for gcn_forward.1']
  #allocation3 [shape = 'u8[1024]{0}', space=smem, size = 0x400, scoped, tag = 'prefetched SMEM operand 0']
  %s0 = inlined_call_operand.vmem [shape: f32[2,3], index: 0, kind: input, shape index: {}]
  %s1 = inlined_call_operand.vmem [shape: bf16[32,128], index: 1, kind: input, shape index: {}]
  %s2 = inlined_call_operand.vmem [shape: bf16[128,384], index: 2, kind: input, shape index: {}]
  %s3 = inlined_call_operand.vmem [shape: bf16[256,128], index: 3, kind: input, shape index: {}]
  %s4 = inlined_call_operand.vmem [shape: bf16[32,32], index: 4, kind: input, shape index: {}]
  %s5 = inlined_call_operand.vmem [shape: f32[32,128], index: 5, kind: input, shape index: {}]
  %s6 = inlined_call_operand.vmem [shape: f32[32,128], index: 6, kind: output, shape index: {}]
  %s7 = sld [smem:[#allocation0]]
  $region30: #{gcn_forward.1} parent=0
    _
  %s9 = ssub.s32 1, %s7
  %s10 = scalar_select 0, %s9, %s7
  %s11 = sshll.u32 %s0, 4
  %s12 = int_to_ptr.vmem [resolvable:$true] %s11
  %14 = dma.vmem_to_smem %s12, 32, [#allocation3], [#allocation2]
  %15 = dma.done [#allocation2], 32
  %16 = sfence
  // Predicated region
  $region2: #{gcn_forward.1} parent=0 // pred_check
    _
  $region3: #{gcn_forward.1} parent=0 // pred_check_branch
    %18 = sbr.rel (0) target = $region5
  $region4: #{gcn_forward.1} parent=0 // pred_region
    _
  $region5: #{gcn_forward.1} parent=0 // pred_fallthru
    _
  // Predicated region
  $region6: #{gcn_forward.1} parent=0 // pred_check
    _
  $region7: #{gcn_forward.1} parent=0 // pred_check_branch
    %20 = sbr.rel (0) target = $region9
  $region8: #{gcn_forward.1} parent=0 // pred_region
    _
  $region9: #{gcn_forward.1} parent=0 // pred_fallthru
    _
  // Predicated region
  $region10: #{gcn_forward.1} parent=0 // pred_check
    _
  $region11: #{gcn_forward.1} parent=0 // pred_check_branch
    %22 = sbr.rel (0) target = $region13
  $region12: #{gcn_forward.1} parent=0 // pred_region
    _
  $region13: #{gcn_forward.1} parent=0 // pred_fallthru
    _
  // Predicated region
  $region14: #{gcn_forward.1} parent=0 // pred_check
    _
  $region15: #{gcn_forward.1} parent=0 // pred_check_branch
    %24 = sbr.rel (0) target = $region17
  $region16: #{gcn_forward.1} parent=0 // pred_region
    _
  $region17: #{gcn_forward.1} parent=0 // pred_fallthru
    _
  // Predicated region
  $region18: #{gcn_forward.1} parent=0 // pred_check
    _
  $region19: #{gcn_forward.1} parent=0 // pred_check_branch
    %26 = sbr.rel (0) target = $region21
  $region20: #{gcn_forward.1} parent=0 // pred_region
    _
  $region21: #{gcn_forward.1} parent=0 // pred_fallthru
    _
  %v28 = vld [vmem:[%s1] sm:$0xf]
  %v29 = vld [vmem:[%s1 + $0x4] sm:$0xf]
  %v30 = vld [vmem:[%s1 + $0x8] sm:$0xf]
  %v31 = vld [vmem:[%s1 + $0xc] sm:$0xf]
  %v32 = vld [vmem:[%s2] sm:$0xff]
  %v33 = vld [vmem:[%s2 + $0x8] sm:$0xf]
  %v34 = vld [vmem:[%s2 + $0xc] sm:$0xff]
  %v35 = vld [vmem:[%s2 + $0x14] sm:$0xf]
  %v36 = vld [vmem:[%s2 + $0x18] sm:$0xff]
  %v37 = vld [vmem:[%s2 + $0x20] sm:$0xf]
  %v38 = vld [vmem:[%s2 + $0x24] sm:$0xff]
  %v39 = vld [vmem:[%s2 + $0x2c] sm:$0xf]
  %v40 = vld [vmem:[%s2 + $0x30] sm:$0xff]
  %v41 = vld [vmem:[%s2 + $0x38] sm:$0xf]
  %v42 = vld [vmem:[%s2 + $0x3c] sm:$0xff]
  %v43 = vld [vmem:[%s2 + $0x44] sm:$0xf]
  %v44 = vld [vmem:[%s2 + $0x48] sm:$0xff]
  %v45 = vld [vmem:[%s2 + $0x50] sm:$0xf]
  %v46 = vld [vmem:[%s2 + $0x54] sm:$0xff]
  %v47 = vld [vmem:[%s2 + $0x5c] sm:$0xf]
  %v48 = vld [vmem:[%s2 + $0x60] sm:$0xff]
  %v49 = vld [vmem:[%s2 + $0x68] sm:$0xf]
  %v50 = vld [vmem:[%s2 + $0x6c] sm:$0xff]
  %v51 = vld [vmem:[%s2 + $0x74] sm:$0xf]
  %v52 = vld [vmem:[%s2 + $0x78] sm:$0xff]
  %v53 = vld [vmem:[%s2 + $0x80] sm:$0xf]
  %v54 = vld [vmem:[%s2 + $0x84] sm:$0xff]
  %v55 = vld [vmem:[%s2 + $0x8c] sm:$0xf]
  %v56 = vld [vmem:[%s2 + $0x90] sm:$0xff]
  %v57 = vld [vmem:[%s2 + $0x98] sm:$0xf]
  %v58 = vld [vmem:[%s2 + $0x9c] sm:$0xff]
  %v59 = vld [vmem:[%s2 + $0xa4] sm:$0xf]
  %v60 = vld [vmem:[%s2 + $0xa8] sm:$0xff]
  %v61 = vld [vmem:[%s2 + $0xb0] sm:$0xf]
  %v62 = vld [vmem:[%s2 + $0xb4] sm:$0xff]
  %v63 = vld [vmem:[%s2 + $0xbc] sm:$0xf]
  %v68 = vunpack.c.l.b16 %v28
  %v69 = vunpack.c.l.b16 %v29
  %v70 = vunpack.c.l.b16 %v30
  %v71 = vunpack.c.l.b16 %v31
  %v72 = vpack.c.b16 %v69, %v68
  %v73 = vpack.c.b16 %v71, %v70
  %v108 = vunpack.c.l.b16 %v32
  %v109 = vunpack.c.h.b16 %v32
  %v110 = vunpack.c.l.b16 %v33
  %v111 = vunpack.c.l.b16 %v34
  %v112 = vunpack.c.h.b16 %v34
  %v113 = vunpack.c.l.b16 %v35
  %v114 = vunpack.c.l.b16 %v36
  %v115 = vunpack.c.h.b16 %v36
  %v116 = vunpack.c.l.b16 %v37
  %v117 = vunpack.c.l.b16 %v38
  %v118 = vunpack.c.h.b16 %v38
  %v119 = vunpack.c.l.b16 %v39
  %v120 = vunpack.c.l.b16 %v40
  %v121 = vunpack.c.h.b16 %v40
  %v122 = vunpack.c.l.b16 %v41
  %v123 = vunpack.c.l.b16 %v42
  %v124 = vunpack.c.h.b16 %v42
  %v125 = vunpack.c.l.b16 %v43
  %v126 = vunpack.c.l.b16 %v44
  %v127 = vunpack.c.h.b16 %v44
  %v128 = vunpack.c.l.b16 %v45
  %v129 = vunpack.c.l.b16 %v46
  %v130 = vunpack.c.h.b16 %v46
  %v131 = vunpack.c.l.b16 %v47
  %v132 = vunpack.c.l.b16 %v48
  %v133 = vunpack.c.h.b16 %v48
  %v134 = vunpack.c.l.b16 %v49
  %v135 = vunpack.c.l.b16 %v50
  %v136 = vunpack.c.h.b16 %v50
  %v137 = vunpack.c.l.b16 %v51
  %v138 = vunpack.c.l.b16 %v52
  %v139 = vunpack.c.h.b16 %v52
  %v140 = vunpack.c.l.b16 %v53
  %v141 = vunpack.c.l.b16 %v54
  %v142 = vunpack.c.h.b16 %v54
  %v143 = vunpack.c.l.b16 %v55
  %v144 = vunpack.c.l.b16 %v56
  %v145 = vunpack.c.h.b16 %v56
  %v146 = vunpack.c.l.b16 %v57
  %v147 = vunpack.c.l.b16 %v58
  %v148 = vunpack.c.h.b16 %v58
  %v149 = vunpack.c.l.b16 %v59
  %v150 = vunpack.c.l.b16 %v60
  %v151 = vunpack.c.h.b16 %v60
  %v152 = vunpack.c.l.b16 %v61
  %v153 = vunpack.c.l.b16 %v62
  %v154 = vunpack.c.h.b16 %v62
  %v155 = vunpack.c.l.b16 %v63
  %v156 = vpack.c.b16 %v111, %v108
  %v157 = vpack.c.b16 %v112, %v109
  %v158 = vpack.c.b16 %v113, %v110
  %v159 = vpack.c.b16 %v117, %v114
  %v160 = vpack.c.b16 %v118, %v115
  %v161 = vpack.c.b16 %v119, %v116
  %v162 = vpack.c.b16 %v123, %v120
  %v163 = vpack.c.b16 %v124, %v121
  %v164 = vpack.c.b16 %v125, %v122
  %v165 = vpack.c.b16 %v129, %v126
  %v166 = vpack.c.b16 %v130, %v127
  %v167 = vpack.c.b16 %v131, %v128
  %v168 = vpack.c.b16 %v135, %v132
  %v169 = vpack.c.b16 %v136, %v133
  %v170 = vpack.c.b16 %v137, %v134
  %v171 = vpack.c.b16 %v141, %v138
  %v172 = vpack.c.b16 %v142, %v139
  %v173 = vpack.c.b16 %v143, %v140
  %v174 = vpack.c.b16 %v147, %v144
  %v175 = vpack.c.b16 %v148, %v145
  %v176 = vpack.c.b16 %v149, %v146
  %v177 = vpack.c.b16 %v153, %v150
  %v178 = vpack.c.b16 %v154, %v151
  %v179 = vpack.c.b16 %v155, %v152
  %204 = vmatprep.subr.bf16.mxu0 %v157
  %205 = vmatpush1.bf16.msra.mxu0 %v156
  %206 = vmatprep.subr.bf16.mxu0 %v160
  %207 = vmatpush1.bf16.msra.mxu0 %v159
  %208 = vmatprep.subr.bf16.mxu0 %v163
  %209 = vmatpush1.bf16.msra.mxu0 %v162
  %210 = vmatprep.subr.bf16.mxu0 %v166
  %211 = vmatpush1.bf16.msra.mxu0 %v165
  %212 = vmatprep.subr.bf16.mxu0 %v169
  %213 = vmatpush1.bf16.msra.mxu0 %v168
  %214 = vmatprep.subr.bf16.mxu0 %v172
  %215 = vmatpush1.bf16.msra.mxu0 %v171
  %216 = vmatprep.subr.bf16.mxu0 %v175
  %217 = vmatpush1.bf16.msra.mxu0 %v174
  %218 = vmatprep.subr.bf16.mxu0 %v178
  %219 = vmatpush1.bf16.msra.mxu0 %v177
  %220 = vmatprep.subr.bf16.mxu0 0
  %221 = vmatpush1.bf16.msra.mxu0 0
  %222 = vmatprep.subr.bf16.mxu0 0
  %223 = vmatpush1.bf16.msra.mxu0 0
  %224 = vmatprep.subr.bf16.mxu0 0
  %225 = vmatpush1.bf16.msra.mxu0 0
  %226 = vmatprep.subr.bf16.mxu0 0
  %227 = vmatpush1.bf16.msra.mxu0 0
  %228 = vmatprep.subr.bf16.mxu0 0
  %229 = vmatpush1.bf16.msra.mxu0 0
  %230 = vmatprep.subr.bf16.mxu0 0
  %231 = vmatpush1.bf16.msra.mxu0 0
  %232 = vmatprep.subr.bf16.mxu0 0
  %233 = vmatpush1.bf16.msra.mxu0 0
  %234 = vmatprep.subr.bf16.mxu0 0
  %235 = vmatpush1.bf16.msra.mxu0 0
  %236 = vmatprep.mubr.bf16.mxu0 0
  %237 = vmatmul.mubr.bf16.gmra.mrb[0].mxu0 %v72
  %v238 = vpop.f32.mrb[0].mxu0
  %v239 = vadd.f32 0.0, %v238
  %v240 = vpop.f32.mrb[0].mxu0
  %v241 = vadd.f32 0.0, %v240
  %v242 = vpop.f32.mrb[0].mxu0
  %v243 = vadd.f32 0.0, %v242
  %v244 = vpop.f32.mrb[0].mxu0
  %v245 = vadd.f32 0.0, %v244
  %246 = vmatprep.mubr.bf16.mxu0 0
  %247 = vmatmul.mubr.bf16.gmra.mrb[0].mxu0 %v73
  %v248 = vpop.f32.mrb[0].mxu0
  %v249 = vadd.f32 0.0, %v248
  %v250 = vpop.f32.mrb[0].mxu0
  %v251 = vadd.f32 0.0, %v250
  %v252 = vpop.f32.mrb[0].mxu0
  %v253 = vadd.f32 0.0, %v252
  %v254 = vpop.f32.mrb[0].mxu0
  %v255 = vadd.f32 0.0, %v254
  %256 = vdwg.mxu0
  %257 = vmatprep.subr.bf16.mxu0 0
  %258 = vmatpush1.bf16.msra.mxu0 %v158
  %259 = vmatprep.subr.bf16.mxu0 0
  %260 = vmatpush1.bf16.msra.mxu0 %v161
  %261 = vmatprep.subr.bf16.mxu0 0
  %262 = vmatpush1.bf16.msra.mxu0 %v164
  %263 = vmatprep.subr.bf16.mxu0 0
  %264 = vmatpush1.bf16.msra.mxu0 %v167
  %265 = vmatprep.subr.bf16.mxu0 0
  %266 = vmatpush1.bf16.msra.mxu0 %v170
  %267 = vmatprep.subr.bf16.mxu0 0
  %268 = vmatpush1.bf16.msra.mxu0 %v173
  %269 = vmatprep.subr.bf16.mxu0 0
  %270 = vmatpush1.bf16.msra.mxu0 %v176
  %271 = vmatprep.subr.bf16.mxu0 0
  %272 = vmatpush1.bf16.msra.mxu0 %v179
  %273 = vmatprep.subr.bf16.mxu0 0
  %274 = vmatpush1.bf16.msra.mxu0 0
  %275 = vmatprep.subr.bf16.mxu0 0
  %276 = vmatpush1.bf16.msra.mxu0 0
  %277 = vmatprep.subr.bf16.mxu0 0
  %278 = vmatpush1.bf16.msra.mxu0 0
  %279 = vmatprep.subr.bf16.mxu0 0
  %280 = vmatpush1.bf16.msra.mxu0 0
  %281 = vmatprep.subr.bf16.mxu0 0
  %282 = vmatpush1.bf16.msra.mxu0 0
  %283 = vmatprep.subr.bf16.mxu0 0
  %284 = vmatpush1.bf16.msra.mxu0 0
  %285 = vmatprep.subr.bf16.mxu0 0
  %286 = vmatpush1.bf16.msra.mxu0 0
  %287 = vmatprep.subr.bf16.mxu0 0
  %288 = vmatpush1.bf16.msra.mxu0 0
  %289 = vmatprep.mubr.bf16.mxu0 0
  %290 = vmatmul.mubr.bf16.gmra.mrb[0].mxu0 %v72
  %v291 = vpop.f32.mrb[0].mxu0
  %v292 = vadd.f32 0.0, %v291
  %v293 = vpop.f32.mrb[0].mxu0
  %v294 = vpop.f32.mrb[0].mxu0
  %v295 = vadd.f32 0.0, %v294
  %v296 = vpop.f32.mrb[0].mxu0
  %297 = vmatprep.mubr.bf16.mxu0 0
  %298 = vmatmul.mubr.bf16.gmra.mrb[0].mxu0 %v73
  %v299 = vpop.f32.mrb[0].mxu0
  %v300 = vadd.f32 0.0, %v299
  %v301 = vpop.f32.mrb[0].mxu0
  %v302 = vpop.f32.mrb[0].mxu0
  %v303 = vadd.f32 0.0, %v302
  %v304 = vpop.f32.mrb[0].mxu0
  %305 = vdwg.mxu0
  %s306 = sld [smem:[#allocation3]]
  %v307 = vstv %s306
  %v308 = vmul.f32 %v239, %v307
  %v309 = vmul.f32 %v243, %v307
  %s310 = sld [smem:[#allocation3 + $0x80]]
  %v311 = vstv %s310
  %v312 = vmul.f32 %v249, %v311
  %v313 = vmul.f32 %v253, %v311
  %s314 = sld [smem:[#allocation3 + $0x1]]
  %v315 = vstv %s314
  %v316 = vmul.f32 %v241, %v315
  %v317 = vmul.f32 %v245, %v315
  %s318 = sld [smem:[#allocation3 + $0x81]]
  %v319 = vstv %s318
  %v320 = vmul.f32 %v251, %v319
  %v321 = vmul.f32 %v255, %v319
  %s322 = sld [smem:[#allocation3 + $0x2]]
  %v323 = vstv %s322
  %v324 = vmul.f32 %v292, %v323
  %v325 = vmul.f32 %v295, %v323
  %s326 = sld [smem:[#allocation3 + $0x82]]
  %v327 = vstv %s326
  %v328 = vmul.f32 %v300, %v327
  %v329 = vmul.f32 %v303, %v327
  %v330 = vpack.c.bf16 %v309, %v308
  %v331 = vpack.c.bf16 %v317, %v316
  %v332 = vpack.c.bf16 %v313, %v312
  %v333 = vpack.c.bf16 %v321, %v320
  %v334 = vld [vmem:[%s3] sm:$0xf]
  %v335 = vld [vmem:[%s3 + $0x4] sm:$0xf]
  %v336 = vld [vmem:[%s3 + $0x8] sm:$0xf]
  %v337 = vld [vmem:[%s3 + $0xc] sm:$0xf]
  %v338 = vld [vmem:[%s3 + $0x10] sm:$0xf]
  %v339 = vld [vmem:[%s3 + $0x14] sm:$0xf]
  %v340 = vld [vmem:[%s3 + $0x18] sm:$0xf]
  %v341 = vld [vmem:[%s3 + $0x1c] sm:$0xf]
  %v342 = vld [vmem:[%s3 + $0x20] sm:$0xf]
  %v343 = vld [vmem:[%s3 + $0x24] sm:$0xf]
  %v344 = vld [vmem:[%s3 + $0x28] sm:$0xf]
  %v345 = vld [vmem:[%s3 + $0x2c] sm:$0xf]
  %v346 = vld [vmem:[%s3 + $0x30] sm:$0xf]
  %v347 = vld [vmem:[%s3 + $0x34] sm:$0xf]
  %v348 = vld [vmem:[%s3 + $0x38] sm:$0xf]
  %v349 = vld [vmem:[%s3 + $0x3c] sm:$0xf]
  %v350 = vld [vmem:[%s3 + $0x40] sm:$0xf]
  %v351 = vld [vmem:[%s3 + $0x44] sm:$0xf]
  %v352 = vld [vmem:[%s3 + $0x48] sm:$0xf]
  %v353 = vld [vmem:[%s3 + $0x4c] sm:$0xf]
  %v354 = vld [vmem:[%s3 + $0x50] sm:$0xf]
  %v355 = vld [vmem:[%s3 + $0x54] sm:$0xf]
  %v356 = vld [vmem:[%s3 + $0x58] sm:$0xf]
  %v357 = vld [vmem:[%s3 + $0x5c] sm:$0xf]
  %v358 = vld [vmem:[%s3 + $0x60] sm:$0xf]
  %v359 = vld [vmem:[%s3 + $0x64] sm:$0xf]
  %v360 = vld [vmem:[%s3 + $0x68] sm:$0xf]
  %v361 = vld [vmem:[%s3 + $0x6c] sm:$0xf]
  %v362 = vld [vmem:[%s3 + $0x70] sm:$0xf]
  %v363 = vld [vmem:[%s3 + $0x74] sm:$0xf]
  %v364 = vld [vmem:[%s3 + $0x78] sm:$0xf]
  %v365 = vld [vmem:[%s3 + $0x7c] sm:$0xf]
  %v366 = vmul.f32 %v324, 3.0
  %v367 = vmul.f32 %v325, 3.0
  %v368 = vmul.f32 %v328, 3.0
  %v369 = vmul.f32 %v329, 3.0
  %v402 = vunpack.c.l.b16 %v334
  %v403 = vunpack.c.l.b16 %v335
  %v404 = vunpack.c.l.b16 %v336
  %v405 = vunpack.c.l.b16 %v337
  %v406 = vunpack.c.l.b16 %v338
  %v407 = vunpack.c.l.b16 %v339
  %v408 = vunpack.c.l.b16 %v340
  %v409 = vunpack.c.l.b16 %v341
  %v410 = vunpack.c.l.b16 %v342
  %v411 = vunpack.c.l.b16 %v343
  %v412 = vunpack.c.l.b16 %v344
  %v413 = vunpack.c.l.b16 %v345
  %v414 = vunpack.c.l.b16 %v346
  %v415 = vunpack.c.l.b16 %v347
  %v416 = vunpack.c.l.b16 %v348
  %v417 = vunpack.c.l.b16 %v349
  %v418 = vunpack.c.l.b16 %v350
  %v419 = vunpack.c.l.b16 %v351
  %v420 = vunpack.c.l.b16 %v352
  %v421 = vunpack.c.l.b16 %v353
  %v422 = vunpack.c.l.b16 %v354
  %v423 = vunpack.c.l.b16 %v355
  %v424 = vunpack.c.l.b16 %v356
  %v425 = vunpack.c.l.b16 %v357
  %v426 = vunpack.c.l.b16 %v358
  %v427 = vunpack.c.l.b16 %v359
  %v428 = vunpack.c.l.b16 %v360
  %v429 = vunpack.c.l.b16 %v361
  %v430 = vunpack.c.l.b16 %v362
  %v431 = vunpack.c.l.b16 %v363
  %v432 = vunpack.c.l.b16 %v364
  %v433 = vunpack.c.l.b16 %v365
  %v434 = vpack.c.b16 %v403, %v402
  %v435 = vpack.c.b16 %v405, %v404
  %v436 = vpack.c.b16 %v407, %v406
  %v437 = vpack.c.b16 %v409, %v408
  %v438 = vpack.c.b16 %v411, %v410
  %v439 = vpack.c.b16 %v413, %v412
  %v440 = vpack.c.b16 %v415, %v414
  %v441 = vpack.c.b16 %v417, %v416
  %v442 = vpack.c.b16 %v419, %v418
  %v443 = vpack.c.b16 %v421, %v420
  %v444 = vpack.c.b16 %v423, %v422
  %v445 = vpack.c.b16 %v425, %v424
  %v446 = vpack.c.b16 %v427, %v426
  %v447 = vpack.c.b16 %v429, %v428
  %v448 = vpack.c.b16 %v431, %v430
  %v449 = vpack.c.b16 %v433, %v432
  %466 = vmatprep.subr.bf16.mxu0 0
  %467 = vmatpush1.bf16.msra.mxu0 %v434
  %468 = vmatprep.subr.bf16.mxu0 0
  %469 = vmatpush1.bf16.msra.mxu0 %v435
  %470 = vmatprep.subr.bf16.mxu0 0
  %471 = vmatpush1.bf16.msra.mxu0 %v436
  %472 = vmatprep.subr.bf16.mxu0 0
  %473 = vmatpush1.bf16.msra.mxu0 %v437
  %474 = vmatprep.subr.bf16.mxu0 0
  %475 = vmatpush1.bf16.msra.mxu0 %v438
  %476 = vmatprep.subr.bf16.mxu0 0
  %477 = vmatpush1.bf16.msra.mxu0 %v439
  %478 = vmatprep.subr.bf16.mxu0 0
  %479 = vmatpush1.bf16.msra.mxu0 %v440
  %480 = vmatprep.subr.bf16.mxu0 0
  %481 = vmatpush1.bf16.msra.mxu0 %v441
  %482 = vmatprep.subr.bf16.mxu0 0
  %483 = vmatpush1.bf16.msra.mxu0 %v442
  %484 = vmatprep.subr.bf16.mxu0 0
  %485 = vmatpush1.bf16.msra.mxu0 %v443
  %486 = vmatprep.subr.bf16.mxu0 0
  %487 = vmatpush1.bf16.msra.mxu0 %v444
  %488 = vmatprep.subr.bf16.mxu0 0
  %489 = vmatpush1.bf16.msra.mxu0 %v445
  %490 = vmatprep.subr.bf16.mxu0 0
  %491 = vmatpush1.bf16.msra.mxu0 %v446
  %492 = vmatprep.subr.bf16.mxu0 0
  %493 = vmatpush1.bf16.msra.mxu0 %v447
  %494 = vmatprep.subr.bf16.mxu0 0
  %495 = vmatpush1.bf16.msra.mxu0 %v448
  %496 = vmatprep.subr.bf16.mxu0 0
  %497 = vmatpush1.bf16.msra.mxu0 %v449
  %498 = vmatprep.mubr.bf16.mxu0 %v331
  %499 = vmatmul.mubr.bf16.gmra.mrb[0].mxu0 %v330
  %v500 = vpop.f32.mrb[0].mxu0
  %v501 = vadd.f32 %v366, %v500
  %v502 = vpop.f32.mrb[0].mxu0
  %v503 = vpop.f32.mrb[0].mxu0
  %v504 = vadd.f32 %v367, %v503
  %v505 = vpop.f32.mrb[0].mxu0
  %506 = vmatprep.mubr.bf16.mxu0 %v333
  %507 = vmatmul.mubr.bf16.gmra.mrb[0].mxu0 %v332
  %v508 = vpop.f32.mrb[0].mxu0
  %v509 = vadd.f32 %v368, %v508
  %v510 = vpop.f32.mrb[0].mxu0
  %v511 = vpop.f32.mrb[0].mxu0
  %v512 = vadd.f32 %v369, %v511
  %v513 = vpop.f32.mrb[0].mxu0
  %514 = vdwg.mxu0
  %v515 = vld [vmem:[%s4] sm:$0xf]
  %v516 = vld [vmem:[%s4 + $0x4] sm:$0xf]
  %v517 = vld [vmem:[%s4 + $0x8] sm:$0xf]
  %v518 = vld [vmem:[%s4 + $0xc] sm:$0xf]
  %v519 = vpack.c.bf16 %v504, %v501
  %v520 = vpack.c.bf16 %v512, %v509
  %v521 = vld [vmem:[%s5] sm:$0xff]
  %v522 = vld [vmem:[%s5 + $0x8] sm:$0xff]
  %v523 = vld [vmem:[%s5 + $0x10] sm:$0xff]
  %v524 = vld [vmem:[%s5 + $0x18] sm:$0xff]
  %v529 = vunpack.c.l.b16 %v515
  %v530 = vunpack.c.l.b16 %v516
  %v531 = vunpack.c.l.b16 %v517
  %v532 = vunpack.c.l.b16 %v518
  %v533 = vpack.c.b16 %v530, %v529
  %v534 = vpack.c.b16 %v532, %v531
  %vm535 = vcmask 261120
  %v537 = vsel %vm535, %v533, 0
  %v540 = vsel %vm535, %v534, 0
  %542 = vmatprep.subr.bf16.mxu0 0
  %543 = vmatpush1.bf16.msra.mxu0 %v519
  %544 = vmatprep.subr.bf16.mxu0 0
  %545 = vmatpush1.bf16.msra.mxu0 %v520
  %546 = vmatprep.subr.bf16.mxu0 0
  %547 = vmatpush1.bf16.msra.mxu0 0
  %548 = vmatprep.subr.bf16.mxu0 0
  %549 = vmatpush1.bf16.msra.mxu0 0
  %550 = vmatprep.subr.bf16.mxu0 0
  %551 = vmatpush1.bf16.msra.mxu0 0
  %552 = vmatprep.subr.bf16.mxu0 0
  %553 = vmatpush1.bf16.msra.mxu0 0
  %554 = vmatprep.subr.bf16.mxu0 0
  %555 = vmatpush1.bf16.msra.mxu0 0
  %556 = vmatprep.subr.bf16.mxu0 0
  %557 = vmatpush1.bf16.msra.mxu0 0
  %558 = vmatprep.subr.bf16.mxu0 0
  %559 = vmatpush1.bf16.msra.mxu0 0
  %560 = vmatprep.subr.bf16.mxu0 0
  %561 = vmatpush1.bf16.msra.mxu0 0
  %562 = vmatprep.subr.bf16.mxu0 0
  %563 = vmatpush1.bf16.msra.mxu0 0
  %564 = vmatprep.subr.bf16.mxu0 0
  %565 = vmatpush1.bf16.msra.mxu0 0
  %566 = vmatprep.subr.bf16.mxu0 0
  %567 = vmatpush1.bf16.msra.mxu0 0
  %568 = vmatprep.subr.bf16.mxu0 0
  %569 = vmatpush1.bf16.msra.mxu0 0
  %570 = vmatprep.subr.bf16.mxu0 0
  %571 = vmatpush1.bf16.msra.mxu0 0
  %572 = vmatprep.subr.bf16.mxu0 0
  %573 = vmatpush1.bf16.msra.mxu0 0
  %574 = vmatprep.mubr.bf16.mxu0 0
  %575 = vmatmul.mubr.bf16.gmra.mrb[0].mxu0 %v537
  %v576 = vpop.f32.mrb[0].mxu0
  %v577 = vadd.f32 %v521, %v576
  %v578 = vpop.f32.mrb[0].mxu0
  %v579 = vpop.f32.mrb[0].mxu0
  %v580 = vadd.f32 %v522, %v579
  %v581 = vpop.f32.mrb[0].mxu0
  %582 = vmatprep.mubr.bf16.mxu0 0
  %583 = vmatmul.mubr.bf16.gmra.mrb[0].mxu0 %v540
  %v584 = vpop.f32.mrb[0].mxu0
  %v585 = vadd.f32 %v523, %v584
  %v586 = vpop.f32.mrb[0].mxu0
  %v587 = vpop.f32.mrb[0].mxu0
  %v588 = vadd.f32 %v524, %v587
  %v589 = vpop.f32.mrb[0].mxu0
  %590 = vdwg.mxu0
  %591 = vst [vmem:[%s6] sm:$0xff] %v577
  %592 = vst [vmem:[%s6 + $0x8] sm:$0xff] %v580
  %593 = vst [vmem:[%s6 + $0x10] sm:$0xff] %v585
  %594 = vst [vmem:[%s6 + $0x18] sm:$0xff] %v588
  // Predicated region
  $region22: #{gcn_forward.1} parent=0 // pred_check
    _
  $region23: #{gcn_forward.1} parent=0 // pred_check_branch
    %596 = sbr.rel (0) target = $region25
  $region24: #{gcn_forward.1} parent=0 // pred_region
    _
  $region25: #{gcn_forward.1} parent=0 // pred_fallthru
    _
  // Predicated region
  $region26: #{gcn_forward.1} parent=0 // pred_check
    _
  $region27: #{gcn_forward.1} parent=0 // pred_check_branch
    %598 = sbr.rel (0) target = $region29
  $region28: #{gcn_forward.1} parent=0 // pred_region
    _
  $region29: #{gcn_forward.1} parent=0 // pred_fallthru
    _

</llo_original>
